<compile_context>
chip_gen: v5e
topology: v5e:2x2
jax: 0.10.0
libtpu: 0.0.40
codegen_flags: <defaults>
</compile_context>

<pallas_src>
import jax
import jax.numpy as jnp
from jax import lax
from jax.experimental import pallas as pl
from jax.experimental.pallas import tpu as pltpu

_LANE_W = 896  # lcm(7, 128): lane-dense AND keeps the (col % 7) mask valid.


def _cdiv(a, b):
    return (a + b - 1) // b


def _round_up(a, b):
    return _cdiv(a, b) * b


def _num_tensorcores():
    """Best-effort TensorCore count (2 on v7x). Falls back to 2 (harmless:
    on single-TC chips the parallel axis just iterates serially)."""
    try:
        info = pltpu.get_tpu_info()
    except Exception:
        return 2
    for name in ("num_cores", "core_count", "num_tensorcores",
                 "tensorcore_count", "num_tensor_cores"):
        v = getattr(info, name, None)
        if v is None:
            continue
        try:
            v = int(v)
        except Exception:
            continue
        if v > 0:
            return v
    return 2


def _make_kernel(tile, slab, w, n_rows, n_inner):
    """Kernel closure over static sizes.

    tile    -- rows per grid step (multiple of slab)
    slab    -- sub-tile height = dtype sublane packing (8 f32 / 16 bf16 / 32 i8)
    w       -- lane width (896)
    n_rows  -- real rows of the input view (rows beyond this are masked)
    n_inner -- length of the reduction grid axis
    """
    n_slabs = tile // slab
    unroll = min(8, max(1, n_slabs))

    def kernel(pred_ref, targ_ref, out_ref, acc_ref):
        p = pl.program_id(0)
        j = pl.program_id(1)
        # Logical (unclamped) first row of this grid step; used for masking.
        block_start = (p * n_inner + j) * tile
        valid = n_rows - block_start          # may be <= 0 for redundant blocks
        row_iota = lax.broadcasted_iota(jnp.int32, (slab, w), 0)

        def body(s, acc):
            r0 = pl.multiple_of(s * slab, slab)
            pv = pred_ref[pl.ds(r0, slab), :].astype(jnp.float32)
            tv = targ_ref[pl.ds(r0, slab), :].astype(jnp.float32)
            # `where` (not mul-by-0) so garbage/NaN in out-of-bounds rows of a
            # partial block cannot leak into the accumulator.
            d = jnp.where(row_iota < (valid - s * slab), pv - tv, 0.0)
            return acc + d * d

        acc8 = lax.fori_loop(0, n_slabs, body,
                             jnp.zeros((slab, w), jnp.float32), unroll=unroll)

        @pl.when(j == 0)
        def _():
            acc_ref[...] = acc8

        @pl.when(j != 0)
        def _():
            acc_ref[...] += acc8

        @pl.when(j == n_inner - 1)
        def _():
            # One-time reduction: sublanes first, then split rot / pos by
            # column position in the 7-wide pose group (w % 7 == 0, and each
            # row starts at a flat offset that is a multiple of 7).
            colsum = jnp.sum(acc_ref[...], axis=0, keepdims=True)   # (1, w)
            col = lax.broadcasted_iota(jnp.int32, colsum.shape, 1)
            is_rot = (col % 7) < 4
            rot_sse = jnp.sum(jnp.where(is_rot, colsum, 0.0))
            pos_sse = jnp.sum(jnp.where(is_rot, 0.0, colsum))  # direct, no cancellation
            lane = lax.broadcasted_iota(jnp.int32, (1, 8, 128), 2)
            out_ref[...] = jnp.where(lane == 0, rot_sse,
                                     jnp.where(lane == 1, pos_sse, 0.0))

    return kernel


def geometric_homoscedastic_loss(prediction, target, sx, sq, *, nposes=1,
                                 row_block=None):
    """Pallas equivalent of GeometricHomoscedasticLoss.forward."""
    feat = 7 * nposes
    assert prediction.shape == target.shape, "prediction/target shape mismatch"
    assert prediction.shape[-1] == feat, "last dim must be 7 * nposes"

    total = int(prediction.size)
    w = _LANE_W
    itemsize = jnp.dtype(prediction.dtype).itemsize
    # Sublane packing of the input dtype: 8 (4-byte), 16 (2-byte), 32 (1-byte).
    slab = 8 * max(1, 4 // max(1, itemsize))

    if row_block is None:
        # ~14 MiB (f32) / ~14 MiB (bf16 @2048) of double-buffered inputs.
        row_block = 1024 if itemsize >= 4 else 2048

    # Free views: ravel/reshape of contiguous data.  A (minimal, < 896 elem)
    # pad is only needed when `total` is not a multiple of 896.
    pred_flat = jnp.ravel(prediction)
    targ_flat = jnp.ravel(target)
    n_rows = _cdiv(total, w)
    pad = n_rows * w - total
    if pad:
        pred_flat = jnp.pad(pred_flat, (0, pad))   # zeros contribute 0 to SSE
        targ_flat = jnp.pad(targ_flat, (0, pad))
    pred2 = pred_flat.reshape(n_rows, w)
    targ2 = targ_flat.reshape(n_rows, w)

    row_block = max(slab, _round_up(int(row_block), slab))
    tile = min(row_block, _round_up(n_rows, slab))
    n_blocks = _cdiv(n_rows, tile)
    n_par = max(1, min(2, _num_tensorcores(), n_blocks))
    n_inner = _cdiv(n_blocks, n_par)
    last_block = n_blocks - 1

    kernel = _make_kernel(tile, slab, w, n_rows, n_inner)

    def in_map(p, j):
        # Clamp so over-covered grid steps re-read the last block; the kernel
        # fully masks their rows (they contribute 0).
        return (jnp.minimum(p * n_inner + j, last_block), 0)

    partials = pl.pallas_call(
        kernel,
        out_shape=jax.ShapeDtypeStruct((n_par, 8, 128), jnp.float32),
        grid=(n_par, n_inner),
        in_specs=[pl.BlockSpec((tile, w), in_map),
                  pl.BlockSpec((tile, w), in_map)],
        out_specs=pl.BlockSpec((1, 8, 128), lambda p, j: (p, 0, 0)),
        scratch_shapes=[pltpu.VMEM((slab, w), jnp.float32)],
        compiler_params=pltpu.CompilerParams(
            dimension_semantics=("parallel", "arbitrary"),
            vmem_limit_bytes=48 * 1024 * 1024),
    )(pred2, targ2)

    # Tiny epilogue in the wrapper.
    rot_sse = jnp.sum(partials[:, 0, 0])
    pos_sse = jnp.sum(partials[:, 0, 1])

    rot_count = jnp.float32((total // 7) * 4)   # true (unpadded) counts
    pos_count = jnp.float32((total // 7) * 3)
    mse_rot = rot_sse / rot_count
    mse_pos = pos_sse / pos_count

    sx = jnp.asarray(sx, jnp.float32)
    sq = jnp.asarray(sq, jnp.float32)
    return jnp.exp(-sx) * mse_pos + sx + jnp.exp(-sq) * mse_rot + sq


def _reference_loss(prediction, target, sx, sq, nposes=1):
    """Plain-JAX reference mirroring the PyTorch module."""
    rot_idx = jnp.concatenate([jnp.arange(4) + 7 * p for p in range(nposes)])
    loc_idx = jnp.concatenate([jnp.arange(3) + 4 + 7 * p for p in range(nposes)])
    p32 = prediction.astype(jnp.float32)
    t32 = target.astype(jnp.float32)
    loss_rot = jnp.mean((p32[..., rot_idx] - t32[..., rot_idx]) ** 2)
    loss_pos = jnp.mean((p32[..., loc_idx] - t32[..., loc_idx]) ** 2)
    return jnp.exp(-sx) * loss_pos + sx + jnp.exp(-sq) * loss_rot + sq


if __name__ == "__main__":
    # nn.Parameter defaults from __init__.
    sx = 0.0
    sq = -3.0

    key = jax.random.PRNGKey(0)
    ks = jax.random.split(key, 10)

    def check(pred, targ, nposes, **kw):
        loss = geometric_homoscedastic_loss(pred, targ, sx, sq,
                                            nposes=nposes, **kw)
        loss = jax.block_until_ready(loss)
        ref = _reference_loss(pred, targ, jnp.float32(sx), jnp.float32(sq),
                              nposes)
        assert jnp.allclose(loss, ref, rtol=1e-4, atol=1e-4), (loss, ref)

    # 1) Tiny input: exercises the minimal-pad path + single partial block.
    check(jax.random.normal(ks[0], (2, 16, 7), dtype=jnp.float32),
          jax.random.normal(ks[1], (2, 16, 7), dtype=jnp.float32), nposes=1)

    # 2) nposes=2, small row_block: multi-step reduction axis + parallel split.
    check(jax.random.normal(ks[2], (2, 2048, 14), dtype=jnp.float32),
          jax.random.normal(ks[3], (2, 2048, 14), dtype=jnp.float32),
          nposes=2, row_block=8)

    # 3) Odd block count + partial last block: exercises the clamped
    #    over-coverage path and in-kernel row masking (no pad).
    check(jax.random.normal(ks[4], (3, 1792, 7), dtype=jnp.float32),
          jax.random.normal(ks[5], (3, 1792, 7), dtype=jnp.float32),
          nposes=1, row_block=16)

    # 4) bf16 input: 16-row sublane packing path.
    check(jax.random.normal(ks[6], (4, 512, 7), dtype=jnp.bfloat16),
          jax.random.normal(ks[7], (4, 512, 7), dtype=jnp.bfloat16), nposes=1)

    # 5) Larger input with default tile: exercises the unrolled slab loop.
    check(jax.random.normal(ks[8], (4, 4096, 7), dtype=jnp.float32),
          jax.random.normal(ks[9], (4, 4096, 7), dtype=jnp.float32), nposes=1)

    print("KERNEL_OK")
</pallas_src>

<mosaic_0001>
module attributes {stable_mosaic.version = 11 : i64} {
  func.func @kernel(%arg0: i32, %arg1: i32, %arg2: memref<8x896xf32, #tpu.memory_space<vmem>>, %arg3: memref<8x896xf32, #tpu.memory_space<vmem>>, %arg4: memref<1x8x128xf32, #tpu.memory_space<vmem>>, %arg5: memref<8x896xf32, #tpu.memory_space<vmem>>) attributes {dimension_semantics = [#tpu.dimension_semantics<parallel>, #tpu.dimension_semantics<arbitrary>], iteration_bounds = array<i64: 1, 1>, scalar_prefetch = 0 : i64, scratch_operands = 1 : i64, tpu.core_type = #tpu.core_type<tc>, window_params = [{transform_indices = @transform_0, window_bounds = array<i64: 8, 896>}, {transform_indices = @transform_1, window_bounds = array<i64: 8, 896>}, {transform_indices = @transform_2, window_bounds = array<i64: 1, 8, 128>}]} {
    %c1_i32 = arith.constant 1 : i32
    %0 = arith.muli %arg0, %c1_i32 : i32
    %1 = arith.addi %0, %arg1 : i32
    %c8_i32 = arith.constant 8 : i32
    %2 = arith.muli %1, %c8_i32 : i32
    %c1_i32_0 = arith.constant 1 : i32
    %3 = arith.subi %c1_i32_0, %2 : i32
    %4 = tpu.iota {dimensions = array<i32: 0>} : vector<8x896xi32>
    %cst = arith.constant 0.000000e+00 : f32
    %5 = vector.broadcast %cst : f32 to vector<8x896xf32>
    %c0_i32 = arith.constant 0 : i32
    %c8_i32_1 = arith.constant 8 : i32
    %6 = arith.muli %c0_i32, %c8_i32_1 : i32
    %7 = tpu.assume_multiple %6, 8 : i32
    %8 = arith.index_cast %7 : i32 to index
    %c0 = arith.constant 0 : index
    %9 = vector.load %arg2[%8, %c0] : memref<8x896xf32, #tpu.memory_space<vmem>>, vector<8x896xf32>
    %10 = arith.index_cast %7 : i32 to index
    %c0_2 = arith.constant 0 : index
    %11 = vector.load %arg3[%10, %c0_2] : memref<8x896xf32, #tpu.memory_space<vmem>>, vector<8x896xf32>
    %c8_i32_3 = arith.constant 8 : i32
    %12 = arith.muli %c0_i32, %c8_i32_3 : i32
    %13 = arith.subi %3, %12 : i32
    %14 = vector.broadcast %13 : i32 to vector<8x896xi32>
    %15 = arith.cmpi slt, %4, %14 : vector<8x896xi32>
    %16 = arith.subf %9, %11 : vector<8x896xf32>
    %cst_4 = arith.constant 0.000000e+00 : f32
    %17 = vector.broadcast %cst_4 : f32 to vector<8x896xf32>
    %18 = arith.select %15, %16, %17 : vector<8x896xi1>, vector<8x896xf32>
    %19 = arith.mulf %18, %18 : vector<8x896xf32>
    %20 = arith.addf %5, %19 : vector<8x896xf32>
    %c1_i32_5 = arith.constant 1 : i32
    %c0_i32_6 = arith.constant 0 : i32
    %21 = arith.cmpi eq, %arg1, %c0_i32_6 : i32
    %22 = arith.extui %21 : i1 to i32
    %c0_i32_7 = arith.constant 0 : i32
    %23 = arith.cmpi ne, %22, %c0_i32_7 : i32
    scf.if %23 {
      %c0_12 = arith.constant 0 : index
      %c0_13 = arith.constant 0 : index
      %30 = vector.load %arg5[%c0_12, %c0_13] : memref<8x896xf32, #tpu.memory_space<vmem>>, vector<8x896xf32>
      tpu.vector_store %arg5[%c0_12, %c0_13], %20 {strides = array<i32>} : memref<8x896xf32, #tpu.memory_space<vmem>>, vector<8x896xf32>,
    } else {
    }
    %c0_i32_8 = arith.constant 0 : i32
    %24 = arith.cmpi ne, %arg1, %c0_i32_8 : i32
    %25 = arith.extui %24 : i1 to i32
    %c0_i32_9 = arith.constant 0 : i32
    %26 = arith.cmpi ne, %25, %c0_i32_9 : i32
    scf.if %26 {
      %c0_12 = arith.constant 0 : index
      %c0_13 = arith.constant 0 : index
      %30 = vector.load %arg5[%c0_12, %c0_13] : memref<8x896xf32, #tpu.memory_space<vmem>>, vector<8x896xf32>
      %31 = arith.addf %30, %20 : vector<8x896xf32>
      %c0_14 = arith.constant 0 : index
      %c0_15 = arith.constant 0 : index
      %32 = vector.load %arg5[%c0_14, %c0_15] : memref<8x896xf32, #tpu.memory_space<vmem>>, vector<8x896xf32>
      tpu.vector_store %arg5[%c0_14, %c0_15], %31 {strides = array<i32>} : memref<8x896xf32, #tpu.memory_space<vmem>>, vector<8x896xf32>,
    } else {
    }
    %c0_i32_10 = arith.constant 0 : i32
    %27 = arith.cmpi eq, %arg1, %c0_i32_10 : i32
    %28 = arith.extui %27 : i1 to i32
    %c0_i32_11 = arith.constant 0 : i32
    %29 = arith.cmpi ne, %28, %c0_i32_11 : i32
    scf.if %29 {
      %c0_12 = arith.constant 0 : index
      %c0_13 = arith.constant 0 : index
      %30 = vector.load %arg5[%c0_12, %c0_13] : memref<8x896xf32, #tpu.memory_space<vmem>>, vector<8x896xf32>
      %cst_14 = arith.constant dense<0.000000e+00> : vector<896xf32>
      %31 = vector.multi_reduction <add>, %30, %cst_14 [0] : vector<8x896xf32> to vector<896xf32>
      %32 = vector.shape_cast %31 : vector<896xf32> to vector<1x896xf32>
      %33 = tpu.iota {dimensions = array<i32: 1>} : vector<1x896xi32>
      %c7_i32 = arith.constant 7 : i32
      %c0_i32_15 = arith.constant 0 : i32
      %34 = arith.cmpi eq, %c7_i32, %c0_i32_15 : i32
      %c1_i32_16 = arith.constant 1 : i32
      %35 = arith.select %34, %c1_i32_16, %c7_i32 : i32
      %36 = vector.broadcast %35 : i32 to vector<1x896xi32>
      %37 = arith.remsi %33, %36 : vector<1x896xi32>
      %c0_i32_17 = arith.constant 0 : i32
      %38 = vector.broadcast %c0_i32_17 : i32 to vector<1x896xi32>
      %39 = arith.cmpi ne, %37, %38 : vector<1x896xi32>
      %c0_i32_18 = arith.constant 0 : i32
      %40 = vector.broadcast %c0_i32_18 : i32 to vector<1x896xi32>
      %41 = arith.cmpi slt, %37, %40 : vector<1x896xi32>
      %c0_i32_19 = arith.constant 0 : i32
      %42 = arith.cmpi slt, %35, %c0_i32_19 : i32
      %43 = vector.broadcast %42 : i1 to vector<1x896xi1>
      %44 = vector.broadcast %43 : vector<1x896xi1> to vector<1x896xi1>
      %45 = arith.xori %41, %44 : vector<1x896xi1>
      %46 = arith.andi %45, %39 : vector<1x896xi1>
      %47 = vector.broadcast %35 : i32 to vector<1x896xi32>
      %48 = arith.addi %37, %47 : vector<1x896xi32>
      %49 = arith.select %46, %48, %37 : vector<1x896xi1>, vector<1x896xi32>
      %c4_i32 = arith.constant 4 : i32
      %50 = vector.broadcast %c4_i32 : i32 to vector<1x896xi32>
      %51 = arith.cmpi slt, %49, %50 : vector<1x896xi32>
      %cst_20 = arith.constant 0.000000e+00 : f32
      %52 = vector.broadcast %cst_20 : f32 to vector<1x896xf32>
      %53 = arith.select %51, %32, %52 : vector<1x896xi1>, vector<1x896xf32>
      %54 = vector.shape_cast %53 : vector<1x896xf32> to vector<1x1x896xf32>
      %cst_21 = arith.constant dense<0.000000e+00> : vector<1xf32>
      %55 = vector.multi_reduction <add>, %54, %cst_21 [1, 2] : vector<1x1x896xf32> to vector<1xf32>
      %56 = vector.shape_cast %55 : vector<1xf32> to vector<1x1x1xf32>
      %57 = vector.extract %56[0, 0, 0] : f32 from vector<1x1x1xf32>
      %cst_22 = arith.constant 0.000000e+00 : f32
      %58 = vector.broadcast %cst_22 : f32 to vector<1x896xf32>
      %59 = arith.select %51, %58, %32 : vector<1x896xi1>, vector<1x896xf32>
      %60 = vector.shape_cast %59 : vector<1x896xf32> to vector<1x1x896xf32>
      %cst_23 = arith.constant dense<0.000000e+00> : vector<1xf32>
      %61 = vector.multi_reduction <add>, %60, %cst_23 [1, 2] : vector<1x1x896xf32> to vector<1xf32>
      %62 = vector.shape_cast %61 : vector<1xf32> to vector<1x1x1xf32>
      %63 = vector.extract %62[0, 0, 0] : f32 from vector<1x1x1xf32>
      %64 = tpu.iota {dimensions = array<i32: 2>} : vector<1x8x128xi32>
      %c0_i32_24 = arith.constant 0 : i32
      %65 = vector.broadcast %c0_i32_24 : i32 to vector<1x8x128xi32>
      %66 = arith.cmpi eq, %64, %65 : vector<1x8x128xi32>
      %c1_i32_25 = arith.constant 1 : i32
      %67 = vector.broadcast %c1_i32_25 : i32 to vector<1x8x128xi32>
      %68 = arith.cmpi eq, %64, %67 : vector<1x8x128xi32>
      %cst_26 = arith.constant 0.000000e+00 : f32
      %69 = vector.broadcast %63 : f32 to vector<1x8x128xf32>
      %70 = vector.broadcast %cst_26 : f32 to vector<1x8x128xf32>
      %71 = arith.select %68, %69, %70 : vector<1x8x128xi1>, vector<1x8x128xf32>
      %72 = vector.broadcast %57 : f32 to vector<1x8x128xf32>
      %73 = arith.select %66, %72, %71 : vector<1x8x128xi1>, vector<1x8x128xf32>
      %c0_27 = arith.constant 0 : index
      %c0_28 = arith.constant 0 : index
      %c0_29 = arith.constant 0 : index
      %74 = vector.load %arg4[%c0_27, %c0_28, %c0_29] : memref<1x8x128xf32, #tpu.memory_space<vmem>>, vector<1x8x128xf32>
      tpu.vector_store %arg4[%c0_27, %c0_28, %c0_29], %73 {strides = array<i32>} : memref<1x8x128xf32, #tpu.memory_space<vmem>>, vector<1x8x128xf32>,
    } else {
    }
    return
  }
  func.func @transform_0(%arg0: i32, %arg1: i32) -> (i32, i32) {
    %c1_i32 = arith.constant 1 : i32
    %0 = arith.muli %arg0, %c1_i32 : i32
    %1 = arith.addi %0, %arg1 : i32
    %c0_i32 = arith.constant 0 : i32
    %2 = arith.minsi %1, %c0_i32 : i32
    %c0_i32_0 = arith.constant 0 : i32
    %c0_i32_1 = arith.constant 0 : i32
    return %2, %c0_i32_0 : i32, i32
  }
  func.func @transform_1(%arg0: i32, %arg1: i32) -> (i32, i32) {
    %c1_i32 = arith.constant 1 : i32
    %0 = arith.muli %arg0, %c1_i32 : i32
    %1 = arith.addi %0, %arg1 : i32
    %c0_i32 = arith.constant 0 : i32
    %2 = arith.minsi %1, %c0_i32 : i32
    %c0_i32_0 = arith.constant 0 : i32
    %c0_i32_1 = arith.constant 0 : i32
    return %2, %c0_i32_0 : i32, i32
  }
  func.func @transform_2(%arg0: i32, %arg1: i32) -> (i32, i32, i32) {
    %c0_i32 = arith.constant 0 : i32
    %c0_i32_0 = arith.constant 0 : i32
    %c0_i32_1 = arith.constant 0 : i32
    return %arg0, %c0_i32, %c0_i32_0 : i32, i32, i32
  }
}

</mosaic_0001>

<llo_original>
// kernel: tpu_custom_call.1
$region0: #{tpu_custom_call.1}
  #allocation0 [shape = 'u32[]', space=smem, size = 0x4, offset = 0x4, fixed_abs, tag = 'smem constant byte address 0x4 - core index']
  #allocation1 [shape = 'u32[72,128]{1,0:T(1,128)}', space=vmem, size = 0x9000, scoped, tag = 'internal scratch']
  #allocation2 [shape = 'f32[8,896]{1,0:T(8,128)}', space=vmem, size = 0x7000, scoped, tag = 'scratch operand']
  %s0 = inlined_call_operand.hbm [shape: f32[1,896], index: 0, kind: input, shape index: {}]
  %s1 = inlined_call_operand.hbm [shape: f32[1,896], index: 1, kind: input, shape index: {}]
  %s2 = inlined_call_operand.hbm [shape: f32[1,8,128], index: 2, kind: output, shape index: {}]
  %s3 = sld [smem:[#allocation0]]
  $region38: #{tpu_custom_call.1} parent=0
    _
  %s5 = ssub.s32 1, %s3
  %s6 = scalar_select 0, %s5, %s3
  $region1: #{tpu_custom_call.1} parent=0
    #allocation3 [shape = 'u8[28672]{0}', space=vmem, size = 0x7000, scoped, tag = 'input window, operand 0, single buffered']
    #allocation4 [shape = 's32[1]{0}', space=sflag, size = 0x4, scoped, tag = 'scoped memory for tpu_custom_call.1']
    #allocation5 [shape = 's32[1]{0}', space=sflag, size = 0x4, scoped, tag = 'scoped memory for tpu_custom_call.1']
    #allocation6 [shape = 'u8[28672]{0}', space=vmem, size = 0x7000, scoped, tag = 'input window, operand 1, single buffered']
    #allocation7 [shape = 's32[1]{0}', space=sflag, size = 0x4, scoped, tag = 'scoped memory for tpu_custom_call.1']
    #allocation8 [shape = 'u8[4096]{0}', space=vmem, size = 0x1000, scoped, tag = 'output window, operand 0, single buffered']
    %7 = vsyncpa [#allocation4], 0
    %8 = vsyncpa [#allocation7], 0
    %9 = vsyncpa [#allocation5], 0
    // Predicated region
    $region2: #{tpu_custom_call.1} parent=1 // pred_check
      _
    $region3: #{tpu_custom_call.1} parent=1 // pred_check_branch
      %11 = sbr.rel (0) target = $region5
    $region4: #{tpu_custom_call.1} parent=1 // pred_region
      %s12 = sadd.s32 0, 0
      %p13 = scmp.lt.s32.totalorder %s12, 0
      %s14 = scalar_select %p13, %s12, 0
      %s15 = smul.u32 8, %s14
      %s16 = ssub.s32 1, %s15
      %s17 = smul.u32 %s16, 7
      %s18 = ssub.s32 56, %s17
      %s19 = sshll.u32 %s18, 4
      %20 = vsyncadd [#allocation4], %s19
      %p21 = scmp.ne.s32.totalorder 0, %s17
      %s22 = smul.addr %s15, 7
      %s23 = scalar_lea.hbm %s0, %s22
      %s24 = smul.u32 7, %s16
      %s25 = sshll.u32 %s23, 4
      %s26 = int_to_ptr.hbm [resolvable:$true] %s25
      %s27 = sshll.u32 [#allocation3], 4
      %s28 = int_to_ptr.vmem [resolvable:$true] %s27
      %s29 = sshll.u32 %s24, 4
      %33 = dma.hbm_to_vmem [thread:$0]  (%p21), %s26, %s29, %s28, [#allocation4], 112, 112, 7
    $region5: #{tpu_custom_call.1} parent=1 // pred_fallthru
      _
    // Predicated region
    $region6: #{tpu_custom_call.1} parent=1 // pred_check
      _
    $region7: #{tpu_custom_call.1} parent=1 // pred_check_branch
      %35 = sbr.rel (0) target = $region9
    $region8: #{tpu_custom_call.1} parent=1 // pred_region
      %s36 = sadd.s32 0, 0
      %p37 = scmp.lt.s32.totalorder %s36, 0
      %s38 = scalar_select %p37, %s36, 0
      %s39 = smul.u32 8, %s38
      %s40 = ssub.s32 1, %s39
      %s41 = smul.u32 %s40, 7
      %s42 = ssub.s32 56, %s41
      %s43 = sshll.u32 %s42, 4
      %44 = vsyncadd [#allocation7], %s43
      %p45 = scmp.ne.s32.totalorder 0, %s41
      %s46 = smul.addr %s39, 7
      %s47 = scalar_lea.hbm %s1, %s46
      %s48 = smul.u32 7, %s40
      %s49 = sshll.u32 %s47, 4
      %s50 = int_to_ptr.hbm [resolvable:$true] %s49
      %s51 = sshll.u32 [#allocation6], 4
      %s52 = int_to_ptr.vmem [resolvable:$true] %s51
      %s53 = sshll.u32 %s48, 4
      %57 = dma.hbm_to_vmem [thread:$0]  (%p45), %s50, %s53, %s52, [#allocation7], 112, 112, 7
    $region9: #{tpu_custom_call.1} parent=1 // pred_fallthru
      _
    // Predicated region
    $region10: #{tpu_custom_call.1} parent=1 // pred_check
      _
    $region11: #{tpu_custom_call.1} parent=1 // pred_check_branch
      %59 = sbr.rel (0) target = $region13
    $region12: #{tpu_custom_call.1} parent=1 // pred_region
      %61 = dma.done [#allocation4], 896
    $region13: #{tpu_custom_call.1} parent=1 // pred_fallthru
      _
    // Predicated region
    $region14: #{tpu_custom_call.1} parent=1 // pred_check
      _
    $region15: #{tpu_custom_call.1} parent=1 // pred_check_branch
      %63 = sbr.rel (0) target = $region17
    $region16: #{tpu_custom_call.1} parent=1 // pred_region
      %65 = dma.done [#allocation7], 896
    $region17: #{tpu_custom_call.1} parent=1 // pred_fallthru
      _
    %s66 = sadd.s32 0, 0
    %p67 = scmp.lt.s32.totalorder %s66, 0
    %s68 = scalar_select %p67, %s66, 0
    %s69 = smul.u32 8, %s68
    %s70 = ssub.s32 1, %s69
    %s71 = smul.u32 %s70, 7
    %s72 = sadd.s32 0, 0
    %p73 = scmp.lt.s32.totalorder %s72, 0
    %s74 = scalar_select %p73, %s72, 0
    %s75 = smul.u32 8, %s74
    %s76 = ssub.s32 1, %s75
    %s77 = smul.u32 %s76, 7
    %s78 = sadd.s32 0, 0
    %s79 = smul.u32 %s78, 8
    %s80 = ssub.s32 1, %s79
    %v81 = vlaneseq
    %v82 = vshrl.u32 %v81, 7
    %s83 = smul.u32 0, 7
    %s84 = scalar_lea.vmem [#allocation3], %s83
    %v85 = vld [vmem:[%s84] sm:$0xff]
    %v86 = vld [vmem:[%s84 + $0x7] sm:$0xff]
    %v87 = vld [vmem:[%s84 + $0xe] sm:$0xff]
    %v88 = vld [vmem:[%s84 + $0x15] sm:$0xff]
    %v89 = vld [vmem:[%s84 + $0x1c] sm:$0xff]
    %v90 = vld [vmem:[%s84 + $0x23] sm:$0xff]
    %v91 = vld [vmem:[%s84 + $0x2a] sm:$0xff]
    %v92 = vld [vmem:[%s84 + $0x31] sm:$0xff]
    %s93 = scalar_lea.vmem [#allocation6], %s83
    %v94 = vld [vmem:[%s93] sm:$0xff]
    %v95 = vld [vmem:[%s93 + $0x7] sm:$0xff]
    %v96 = vld [vmem:[%s93 + $0xe] sm:$0xff]
    %v97 = vld [vmem:[%s93 + $0x15] sm:$0xff]
    %v98 = vld [vmem:[%s93 + $0x1c] sm:$0xff]
    %v99 = vld [vmem:[%s93 + $0x23] sm:$0xff]
    %v100 = vld [vmem:[%s93 + $0x2a] sm:$0xff]
    %v101 = vld [vmem:[%s93 + $0x31] sm:$0xff]
    %v102 = vstv %s80
    %vm103 = vcmp.lt.s32.totalorder %v82, %v102
    %v104 = vsub.f32 %v85, %v94
    %v105 = vsub.f32 %v86, %v95
    %v106 = vsub.f32 %v87, %v96
    %v107 = vsub.f32 %v88, %v97
    %v108 = vsub.f32 %v89, %v98
    %v109 = vsub.f32 %v90, %v99
    %v110 = vsub.f32 %v91, %v100
    %v111 = vsub.f32 %v92, %v101
    %120 = vst [vmem:[#allocation1] ss:$9 sm:$0xff] %v104
    %s121 = scalar_lea.vmem [#allocation1], 1
    %122 = vst [vmem:[%s121] ss:$9 sm:$0xff] %v105
    %s123 = scalar_lea.vmem [#allocation1], 2
    %124 = vst [vmem:[%s123] ss:$9 sm:$0xff] %v106
    %s125 = scalar_lea.vmem [#allocation1], 3
    %126 = vst [vmem:[%s125] ss:$9 sm:$0xff] %v107
    %s127 = scalar_lea.vmem [#allocation1], 4
    %128 = vst [vmem:[%s127] ss:$9 sm:$0xff] %v108
    %s129 = scalar_lea.vmem [#allocation1], 5
    %130 = vst [vmem:[%s129] ss:$9 sm:$0xff] %v109
    %s131 = scalar_lea.vmem [#allocation1], 6
    %132 = vst [vmem:[%s131] ss:$9 sm:$0xff] %v110
    %s133 = scalar_lea.vmem [#allocation1], 7
    %134 = vst [vmem:[%s133] ss:$9 sm:$0xff] %v111
    %v135 = vld [vmem:[#allocation1] sm:$0xff]
    %v136 = vld [vmem:[#allocation1 + $0x9] sm:$0xff]
    %v137 = vld [vmem:[#allocation1 + $0x12] sm:$0xff]
    %v138 = vld [vmem:[#allocation1 + $0x1b] sm:$0xff]
    %v139 = vld [vmem:[#allocation1 + $0x24] sm:$0xff]
    %v140 = vld [vmem:[#allocation1 + $0x2d] sm:$0xff]
    %v141 = vld [vmem:[#allocation1 + $0x36] sm:$0xff]
    %v149 = vsel %vm103, %v135, 0.0
    %v150 = vsel %vm103, %v136, 0.0
    %v151 = vsel %vm103, %v137, 0.0
    %v152 = vsel %vm103, %v138, 0.0
    %v153 = vsel %vm103, %v139, 0.0
    %v154 = vsel %vm103, %v140, 0.0
    %v155 = vsel %vm103, %v141, 0.0
    %v156 = vmul.f32 %v149, %v149
    %v157 = vmul.f32 %v150, %v150
    %v158 = vmul.f32 %v151, %v151
    %v159 = vmul.f32 %v152, %v152
    %v160 = vmul.f32 %v153, %v153
    %v161 = vmul.f32 %v154, %v154
    %v162 = vmul.f32 %v155, %v155
    %v163 = vadd.f32 %v156, 0.0
    %v164 = vadd.f32 %v157, 0.0
    %v165 = vadd.f32 %v158, 0.0
    %v166 = vadd.f32 %v159, 0.0
    %v167 = vadd.f32 %v160, 0.0
    %v168 = vadd.f32 %v161, 0.0
    %v169 = vadd.f32 %v162, 0.0
    %p170 = scmp.eq.s32.totalorder 0, 0
    // Predicated region
    $region18: #{tpu_custom_call.1} parent=1 // pred_check
      %p171 = pneg %p170
    $region19: #{tpu_custom_call.1} parent=1 // pred_check_branch
      %173 = sbr.rel (%p171) target = $region21
    $region20: #{tpu_custom_call.1} parent=1 // pred_region
      %174 = vst [vmem:[#allocation2] sm:$0xff] %v163
      %175 = vst [vmem:[#allocation2 + $0x8] sm:$0xff] %v164
      %176 = vst [vmem:[#allocation2 + $0x10] sm:$0xff] %v165
      %177 = vst [vmem:[#allocation2 + $0x18] sm:$0xff] %v166
      %178 = vst [vmem:[#allocation2 + $0x20] sm:$0xff] %v167
      %179 = vst [vmem:[#allocation2 + $0x28] sm:$0xff] %v168
      %180 = vst [vmem:[#allocation2 + $0x30] sm:$0xff] %v169
    $region21: #{tpu_custom_call.1} parent=1 // pred_fallthru
      _
    %p181 = scmp.ne.s32.totalorder 0, 0
    // Predicated region
    $region22: #{tpu_custom_call.1} parent=1 // pred_check
      %p182 = pneg %p181
    $region23: #{tpu_custom_call.1} parent=1 // pred_check_branch
      %184 = sbr.rel (%p182) target = $region25
    $region24: #{tpu_custom_call.1} parent=1 // pred_region
      %v185 = vld [vmem:[#allocation2] sm:$0xff]
      %v186 = vld [vmem:[#allocation2 + $0x8] sm:$0xff]
      %v187 = vld [vmem:[#allocation2 + $0x10] sm:$0xff]
      %v188 = vld [vmem:[#allocation2 + $0x18] sm:$0xff]
      %v189 = vld [vmem:[#allocation2 + $0x20] sm:$0xff]
      %v190 = vld [vmem:[#allocation2 + $0x28] sm:$0xff]
      %v191 = vld [vmem:[#allocation2 + $0x30] sm:$0xff]
      %v192 = vadd.f32 %v185, %v163
      %v193 = vadd.f32 %v186, %v164
      %v194 = vadd.f32 %v187, %v165
      %v195 = vadd.f32 %v188, %v166
      %v196 = vadd.f32 %v189, %v167
      %v197 = vadd.f32 %v190, %v168
      %v198 = vadd.f32 %v191, %v169
      %199 = vst [vmem:[#allocation2] sm:$0xff] %v192
      %200 = vst [vmem:[#allocation2 + $0x8] sm:$0xff] %v193
      %201 = vst [vmem:[#allocation2 + $0x10] sm:$0xff] %v194
      %202 = vst [vmem:[#allocation2 + $0x18] sm:$0xff] %v195
      %203 = vst [vmem:[#allocation2 + $0x20] sm:$0xff] %v196
      %204 = vst [vmem:[#allocation2 + $0x28] sm:$0xff] %v197
      %205 = vst [vmem:[#allocation2 + $0x30] sm:$0xff] %v198
    $region25: #{tpu_custom_call.1} parent=1 // pred_fallthru
      _
    // Predicated region
    $region26: #{tpu_custom_call.1} parent=1 // pred_check
      %p206 = pneg %p170
    $region27: #{tpu_custom_call.1} parent=1 // pred_check_branch
      %208 = sbr.rel (%p206) target = $region29
    $region28: #{tpu_custom_call.1} parent=1 // pred_region
      %v209 = vld [vmem:[#allocation2] sm:$0xff]
      %v210 = vld [vmem:[#allocation2 + $0x8] sm:$0xff]
      %v211 = vld [vmem:[#allocation2 + $0x10] sm:$0xff]
      %v212 = vld [vmem:[#allocation2 + $0x18] sm:$0xff]
      %v213 = vld [vmem:[#allocation2 + $0x20] sm:$0xff]
      %v214 = vld [vmem:[#allocation2 + $0x28] sm:$0xff]
      %v215 = vld [vmem:[#allocation2 + $0x30] sm:$0xff]
      %v216 = vrot.slane %v209, 4
      %v217 = vadd.f32 %v209, %v216
      %v218 = vrot.slane %v217, 2
      %v219 = vadd.f32 %v217, %v218
      %v220 = vrot.slane %v219, 1
      %v221 = vadd.f32 %v219, %v220
      %v222 = vrot.slane %v210, 4
      %v223 = vadd.f32 %v210, %v222
      %v224 = vrot.slane %v223, 2
      %v225 = vadd.f32 %v223, %v224
      %v226 = vrot.slane %v225, 1
      %v227 = vadd.f32 %v225, %v226
      %v228 = vrot.slane %v211, 4
      %v229 = vadd.f32 %v211, %v228
      %v230 = vrot.slane %v229, 2
      %v231 = vadd.f32 %v229, %v230
      %v232 = vrot.slane %v231, 1
      %v233 = vadd.f32 %v231, %v232
      %v234 = vrot.slane %v212, 4
      %v235 = vadd.f32 %v212, %v234
      %v236 = vrot.slane %v235, 2
      %v237 = vadd.f32 %v235, %v236
      %v238 = vrot.slane %v237, 1
      %v239 = vadd.f32 %v237, %v238
      %v240 = vrot.slane %v213, 4
      %v241 = vadd.f32 %v213, %v240
      %v242 = vrot.slane %v241, 2
      %v243 = vadd.f32 %v241, %v242
      %v244 = vrot.slane %v243, 1
      %v245 = vadd.f32 %v243, %v244
      %v246 = vrot.slane %v214, 4
      %v247 = vadd.f32 %v214, %v246
      %v248 = vrot.slane %v247, 2
      %v249 = vadd.f32 %v247, %v248
      %v250 = vrot.slane %v249, 1
      %v251 = vadd.f32 %v249, %v250
      %v252 = vrot.slane %v215, 4
      %v253 = vadd.f32 %v215, %v252
      %v254 = vrot.slane %v253, 2
      %v255 = vadd.f32 %v253, %v254
      %v256 = vrot.slane %v255, 1
      %v257 = vadd.f32 %v255, %v256
      %v258 = vlaneseq
      %v259 = vand.u32 %v258, 127
      %v260 = vadd.s32 %v259, 128
      %v261 = vadd.s32 %v259, 256
      %v262 = vadd.s32 %v259, 384
      %v263 = vadd.s32 %v259, 512
      %v264 = vadd.s32 %v259, 640
      %v265 = vadd.s32 %v259, 768
      %vm266 = vcmp.lt.s32.totalorder %v259, 0
      %v267 = vsub.s32 0, %v259
      %v268 = vsel %vm266, %v267, %v259
      %v269 = vand.u32 %v268, 65535
      %v270 = vshrl.u32 %v268, 16
      %v272 = vmul.u32 %v269, 9362
      %v273 = vmul.u32 %v269, 37449
      %v274 = vmul.u32 %v270, 9362
      %v275 = vmul.u32 %v270, 37449
      %v276 = vshll.u32 %v273, 16
      %v277 = vshrl.u32 %v273, 16
      %v278 = vshll.u32 %v274, 16
      %v279 = vshrl.u32 %v274, 16
      %vm280 = vc.u32 %v272, %v276
      %v281 = vsel %vm280, 1, 0
      %v282 = vadd.s32 %v272, %v276
      %v283 = vadd.s32 %v275, %v281
      %vm284 = vc.u32 %v282, %v278
      %v285 = vsel %vm284, 1, 0
      %v286 = vadd.s32 %v282, %v278
      %v287 = vadd.s32 %v283, %v285
      %v288 = vadd.s32 %v287, %v277
      %v289 = vadd.s32 %v288, %v279
      %vm290 = vc.u32 %v286, 2454267026
      %v291 = vsel %vm290, 1, 0
      %v292 = vadd.s32 %v289, %v291
      %v293 = vshrl.u32 %v292, 2
      %v294 = vmul.u32 %v293, 7
      %v295 = vsub.s32 %v268, %v294
      %v296 = vsub.s32 0, %v295
      %v297 = vsel %vm266, %v296, %v295
      %vm298 = vcmp.lt.s32.totalorder %v260, 0
      %v299 = vsub.s32 0, %v260
      %v300 = vsel %vm298, %v299, %v260
      %v301 = vand.u32 %v300, 65535
      %v302 = vshrl.u32 %v300, 16
      %v304 = vmul.u32 %v301, 9362
      %v305 = vmul.u32 %v301, 37449
      %v306 = vmul.u32 %v302, 9362
      %v307 = vmul.u32 %v302, 37449
      %v308 = vshll.u32 %v305, 16
      %v309 = vshrl.u32 %v305, 16
      %v310 = vshll.u32 %v306, 16
      %v311 = vshrl.u32 %v306, 16
      %vm312 = vc.u32 %v304, %v308
      %v313 = vsel %vm312, 1, 0
      %v314 = vadd.s32 %v304, %v308
      %v315 = vadd.s32 %v307, %v313
      %vm316 = vc.u32 %v314, %v310
      %v317 = vsel %vm316, 1, 0
      %v318 = vadd.s32 %v314, %v310
      %v319 = vadd.s32 %v315, %v317
      %v320 = vadd.s32 %v319, %v309
      %v321 = vadd.s32 %v320, %v311
      %vm322 = vc.u32 %v318, 2454267026
      %v323 = vsel %vm322, 1, 0
      %v324 = vadd.s32 %v321, %v323
      %v325 = vshrl.u32 %v324, 2
      %v326 = vmul.u32 %v325, 7
      %v327 = vsub.s32 %v300, %v326
      %v328 = vsub.s32 0, %v327
      %v329 = vsel %vm298, %v328, %v327
      %vm330 = vcmp.lt.s32.totalorder %v261, 0
      %v331 = vsub.s32 0, %v261
      %v332 = vsel %vm330, %v331, %v261
      %v333 = vand.u32 %v332, 65535
      %v334 = vshrl.u32 %v332, 16
      %v336 = vmul.u32 %v333, 9362
      %v337 = vmul.u32 %v333, 37449
      %v338 = vmul.u32 %v334, 9362
      %v339 = vmul.u32 %v334, 37449
      %v340 = vshll.u32 %v337, 16
      %v341 = vshrl.u32 %v337, 16
      %v342 = vshll.u32 %v338, 16
      %v343 = vshrl.u32 %v338, 16
      %vm344 = vc.u32 %v336, %v340
      %v345 = vsel %vm344, 1, 0
      %v346 = vadd.s32 %v336, %v340
      %v347 = vadd.s32 %v339, %v345
      %vm348 = vc.u32 %v346, %v342
      %v349 = vsel %vm348, 1, 0
      %v350 = vadd.s32 %v346, %v342
      %v351 = vadd.s32 %v347, %v349
      %v352 = vadd.s32 %v351, %v341
      %v353 = vadd.s32 %v352, %v343
      %vm354 = vc.u32 %v350, 2454267026
      %v355 = vsel %vm354, 1, 0
      %v356 = vadd.s32 %v353, %v355
      %v357 = vshrl.u32 %v356, 2
      %v358 = vmul.u32 %v357, 7
      %v359 = vsub.s32 %v332, %v358
      %v360 = vsub.s32 0, %v359
      %v361 = vsel %vm330, %v360, %v359
      %vm362 = vcmp.lt.s32.totalorder %v262, 0
      %v363 = vsub.s32 0, %v262
      %v364 = vsel %vm362, %v363, %v262
      %v365 = vand.u32 %v364, 65535
      %v366 = vshrl.u32 %v364, 16
      %v368 = vmul.u32 %v365, 9362
      %v369 = vmul.u32 %v365, 37449
      %v370 = vmul.u32 %v366, 9362
      %v371 = vmul.u32 %v366, 37449
      %v372 = vshll.u32 %v369, 16
      %v373 = vshrl.u32 %v369, 16
      %v374 = vshll.u32 %v370, 16
      %v375 = vshrl.u32 %v370, 16
      %vm376 = vc.u32 %v368, %v372
      %v377 = vsel %vm376, 1, 0
      %v378 = vadd.s32 %v368, %v372
      %v379 = vadd.s32 %v371, %v377
      %vm380 = vc.u32 %v378, %v374
      %v381 = vsel %vm380, 1, 0
      %v382 = vadd.s32 %v378, %v374
      %v383 = vadd.s32 %v379, %v381
      %v384 = vadd.s32 %v383, %v373
      %v385 = vadd.s32 %v384, %v375
      %vm386 = vc.u32 %v382, 2454267026
      %v387 = vsel %vm386, 1, 0
      %v388 = vadd.s32 %v385, %v387
      %v389 = vshrl.u32 %v388, 2
      %v390 = vmul.u32 %v389, 7
      %v391 = vsub.s32 %v364, %v390
      %v392 = vsub.s32 0, %v391
      %v393 = vsel %vm362, %v392, %v391
      %vm394 = vcmp.lt.s32.totalorder %v263, 0
      %v395 = vsub.s32 0, %v263
      %v396 = vsel %vm394, %v395, %v263
      %v397 = vand.u32 %v396, 65535
      %v398 = vshrl.u32 %v396, 16
      %v400 = vmul.u32 %v397, 9362
      %v401 = vmul.u32 %v397, 37449
      %v402 = vmul.u32 %v398, 9362
      %v403 = vmul.u32 %v398, 37449
      %v404 = vshll.u32 %v401, 16
      %v405 = vshrl.u32 %v401, 16
      %v406 = vshll.u32 %v402, 16
      %v407 = vshrl.u32 %v402, 16
      %vm408 = vc.u32 %v400, %v404
      %v409 = vsel %vm408, 1, 0
      %v410 = vadd.s32 %v400, %v404
      %v411 = vadd.s32 %v403, %v409
      %vm412 = vc.u32 %v410, %v406
      %v413 = vsel %vm412, 1, 0
      %v414 = vadd.s32 %v410, %v406
      %v415 = vadd.s32 %v411, %v413
      %v416 = vadd.s32 %v415, %v405
      %v417 = vadd.s32 %v416, %v407
      %vm418 = vc.u32 %v414, 2454267026
      %v419 = vsel %vm418, 1, 0
      %v420 = vadd.s32 %v417, %v419
      %v421 = vshrl.u32 %v420, 2
      %v422 = vmul.u32 %v421, 7
      %v423 = vsub.s32 %v396, %v422
      %v424 = vsub.s32 0, %v423
      %v425 = vsel %vm394, %v424, %v423
      %vm426 = vcmp.lt.s32.totalorder %v264, 0
      %v427 = vsub.s32 0, %v264
      %v428 = vsel %vm426, %v427, %v264
      %v429 = vand.u32 %v428, 65535
      %v430 = vshrl.u32 %v428, 16
      %v432 = vmul.u32 %v429, 9362
      %v433 = vmul.u32 %v429, 37449
      %v434 = vmul.u32 %v430, 9362
      %v435 = vmul.u32 %v430, 37449
      %v436 = vshll.u32 %v433, 16
      %v437 = vshrl.u32 %v433, 16
      %v438 = vshll.u32 %v434, 16
      %v439 = vshrl.u32 %v434, 16
      %vm440 = vc.u32 %v432, %v436
      %v441 = vsel %vm440, 1, 0
      %v442 = vadd.s32 %v432, %v436
      %v443 = vadd.s32 %v435, %v441
      %vm444 = vc.u32 %v442, %v438
      %v445 = vsel %vm444, 1, 0
      %v446 = vadd.s32 %v442, %v438
      %v447 = vadd.s32 %v443, %v445
      %v448 = vadd.s32 %v447, %v437
      %v449 = vadd.s32 %v448, %v439
      %vm450 = vc.u32 %v446, 2454267026
      %v451 = vsel %vm450, 1, 0
      %v452 = vadd.s32 %v449, %v451
      %v453 = vshrl.u32 %v452, 2
      %v454 = vmul.u32 %v453, 7
      %v455 = vsub.s32 %v428, %v454
      %v456 = vsub.s32 0, %v455
      %v457 = vsel %vm426, %v456, %v455
      %vm458 = vcmp.lt.s32.totalorder %v265, 0
      %v459 = vsub.s32 0, %v265
      %v460 = vsel %vm458, %v459, %v265
      %v461 = vand.u32 %v460, 65535
      %v462 = vshrl.u32 %v460, 16
      %v464 = vmul.u32 %v461, 9362
      %v465 = vmul.u32 %v461, 37449
      %v466 = vmul.u32 %v462, 9362
      %v467 = vmul.u32 %v462, 37449
      %v468 = vshll.u32 %v465, 16
      %v469 = vshrl.u32 %v465, 16
      %v470 = vshll.u32 %v466, 16
      %v471 = vshrl.u32 %v466, 16
      %vm472 = vc.u32 %v464, %v468
      %v473 = vsel %vm472, 1, 0
      %v474 = vadd.s32 %v464, %v468
      %v475 = vadd.s32 %v467, %v473
      %vm476 = vc.u32 %v474, %v470
      %v477 = vsel %vm476, 1, 0
      %v478 = vadd.s32 %v474, %v470
      %v479 = vadd.s32 %v475, %v477
      %v480 = vadd.s32 %v479, %v469
      %v481 = vadd.s32 %v480, %v471
      %vm482 = vc.u32 %v478, 2454267026
      %v483 = vsel %vm482, 1, 0
      %v484 = vadd.s32 %v481, %v483
      %v485 = vshrl.u32 %v484, 2
      %v486 = vmul.u32 %v485, 7
      %v487 = vsub.s32 %v460, %v486
      %v488 = vsub.s32 0, %v487
      %v489 = vsel %vm458, %v488, %v487
      %vm490 = vcmp.ne.s32.totalorder %v297, 0
      %vm491 = vcmp.ne.s32.totalorder %v329, 0
      %vm492 = vcmp.ne.s32.totalorder %v361, 0
      %vm493 = vcmp.ne.s32.totalorder %v393, 0
      %vm494 = vcmp.ne.s32.totalorder %v425, 0
      %vm495 = vcmp.ne.s32.totalorder %v457, 0
      %vm496 = vcmp.ne.s32.totalorder %v489, 0
      %vm497 = vcmp.lt.s32.totalorder %v297, 0
      %vm498 = vcmp.lt.s32.totalorder %v329, 0
      %vm499 = vcmp.lt.s32.totalorder %v361, 0
      %vm500 = vcmp.lt.s32.totalorder %v393, 0
      %vm501 = vcmp.lt.s32.totalorder %v425, 0
      %vm502 = vcmp.lt.s32.totalorder %v457, 0
      %vm503 = vcmp.lt.s32.totalorder %v489, 0
      %vm504 = vmand %vm497, %vm490
      %vm505 = vmand %vm498, %vm491
      %vm506 = vmand %vm499, %vm492
      %vm507 = vmand %vm500, %vm493
      %vm508 = vmand %vm501, %vm494
      %vm509 = vmand %vm502, %vm495
      %vm510 = vmand %vm503, %vm496
      %v511 = vadd.s32 %v297, 7
      %v512 = vadd.s32 %v329, 7
      %v513 = vadd.s32 %v361, 7
      %v514 = vadd.s32 %v393, 7
      %v515 = vadd.s32 %v425, 7
      %v516 = vadd.s32 %v457, 7
      %v517 = vadd.s32 %v489, 7
      %v518 = vsel %vm504, %v511, %v297
      %v519 = vsel %vm505, %v512, %v329
      %v520 = vsel %vm506, %v513, %v361
      %v521 = vsel %vm507, %v514, %v393
      %v522 = vsel %vm508, %v515, %v425
      %v523 = vsel %vm509, %v516, %v457
      %v524 = vsel %vm510, %v517, %v489
      %vm525 = vcmp.lt.s32.totalorder %v518, 4
      %vm526 = vcmp.lt.s32.totalorder %v519, 4
      %vm527 = vcmp.lt.s32.totalorder %v520, 4
      %vm528 = vcmp.lt.s32.totalorder %v521, 4
      %vm529 = vcmp.lt.s32.totalorder %v522, 4
      %vm530 = vcmp.lt.s32.totalorder %v523, 4
      %vm531 = vcmp.lt.s32.totalorder %v524, 4
      %v532 = vsel %vm525, %v221, 0.0
      %v533 = vsel %vm526, %v227, 0.0
      %v534 = vsel %vm527, %v233, 0.0
      %v535 = vsel %vm528, %v239, 0.0
      %v536 = vsel %vm529, %v245, 0.0
      %v537 = vsel %vm530, %v251, 0.0
      %v538 = vsel %vm531, %v257, 0.0
      %vm539 = vcmask 1040384
      %v540 = vsel %vm539, %v532, 0.0
      %v541 = vsel %vm539, %v533, 0.0
      %v542 = vadd.f32 %v540, %v541
      %v543 = vsel %vm539, %v534, 0.0
      %v544 = vadd.f32 %v542, %v543
      %v545 = vsel %vm539, %v535, 0.0
      %v546 = vadd.f32 %v544, %v545
      %v547 = vsel %vm539, %v536, 0.0
      %v548 = vadd.f32 %v546, %v547
      %v549 = vsel %vm539, %v537, 0.0
      %v550 = vadd.f32 %v548, %v549
      %v551 = vsel %vm539, %v538, 0.0
      %v552 = vadd.f32 %v550, %v551
      %553 = vadd.xlane.f32.xlu0 %v552
      %v554 = vpop.xlane.xlu0 %553
      %v555 = vrot.slane %v554, 4
      %v556 = vadd.f32 %v554, %v555
      %v557 = vrot.slane %v556, 2
      %v558 = vadd.f32 %v556, %v557
      %v559 = vrot.slane %v558, 1
      %v560 = vadd.f32 %v558, %v559
      %s561 = vtos %v560
      %v562 = vsel %vm525, 0.0, %v221
      %v563 = vsel %vm526, 0.0, %v227
      %v564 = vsel %vm527, 0.0, %v233
      %v565 = vsel %vm528, 0.0, %v239
      %v566 = vsel %vm529, 0.0, %v245
      %v567 = vsel %vm530, 0.0, %v251
      %v568 = vsel %vm531, 0.0, %v257
      %v569 = vsel %vm539, %v562, 0.0
      %v570 = vsel %vm539, %v563, 0.0
      %v571 = vadd.f32 %v569, %v570
      %v572 = vsel %vm539, %v564, 0.0
      %v573 = vadd.f32 %v571, %v572
      %v574 = vsel %vm539, %v565, 0.0
      %v575 = vadd.f32 %v573, %v574
      %v576 = vsel %vm539, %v566, 0.0
      %v577 = vadd.f32 %v575, %v576
      %v578 = vsel %vm539, %v567, 0.0
      %v579 = vadd.f32 %v577, %v578
      %v580 = vsel %vm539, %v568, 0.0
      %v581 = vadd.f32 %v579, %v580
      %582 = vadd.xlane.f32.xlu0 %v581
      %v583 = vpop.xlane.xlu0 %582
      %v584 = vrot.slane %v583, 4
      %v585 = vadd.f32 %v583, %v584
      %v586 = vrot.slane %v585, 2
      %v587 = vadd.f32 %v585, %v586
      %v588 = vrot.slane %v587, 1
      %v589 = vadd.f32 %v587, %v588
      %s590 = vtos %v589
      %vm591 = vcmp.eq.s32.totalorder %v259, 0
      %vm592 = vcmp.eq.s32.totalorder %v259, 1
      %v593 = vstv %s590
      %v594 = vsel %vm592, %v593, 0.0
      %v595 = vstv %s561
      %v596 = vsel %vm591, %v595, %v594
      %597 = vst [vmem:[#allocation8] sm:$0xff] %v596
    $region29: #{tpu_custom_call.1} parent=1 // pred_fallthru
      _
    // Predicated region
    $region30: #{tpu_custom_call.1} parent=1 // pred_check
      _
    $region31: #{tpu_custom_call.1} parent=1 // pred_check_branch
      %599 = sbr.rel (0) target = $region33
    $region32: #{tpu_custom_call.1} parent=1 // pred_region
      %601 = vsyncadd [#allocation5], 0
      %s603 = sshll.u32 [#allocation8], 4
      %s604 = int_to_ptr.vmem [resolvable:$true] %s603
      %s605 = sshll.u32 %s2, 4
      %s606 = int_to_ptr.hbm [resolvable:$true] %s605
      %608 = dma.vmem_to_hbm [thread:$0]  %s604, 128, %s606, [#allocation5]
    $region33: #{tpu_custom_call.1} parent=1 // pred_fallthru
      _
    // Predicated region
    $region34: #{tpu_custom_call.1} parent=1 // pred_check
      _
    $region35: #{tpu_custom_call.1} parent=1 // pred_check_branch
      %610 = sbr.rel (0) target = $region37
    $region36: #{tpu_custom_call.1} parent=1 // pred_region
      %612 = dma.done [#allocation5], 128
    $region37: #{tpu_custom_call.1} parent=1 // pred_fallthru
      _
    %613 = vsyncpa [#allocation4], 1
    %614 = vsyncpa [#allocation7], 1
    %615 = vsyncpa [#allocation5], 1

</llo_original>
